<compile_context>
chip_gen: v5e
topology: v5e:2x2
jax: 0.10.0
libtpu: 0.0.40
codegen_flags: <defaults>
</compile_context>

<pallas_src>
import functools

import jax
import jax.numpy as jnp
from jax.experimental import pallas as pl
from jax.experimental.pallas import tpu as pltpu


def shallow_ae_kernel(x_ref, w1_ref, b1_ref, w2_ref, b2_ref, o_ref, *, act_dtype):
    # Cast the x tile to the MXU dtype inside the kernel (hides under DMA/MXU).
    xq = x_ref[...].astype(w1_ref.dtype)
    # Encoder: x @ W1 + b1 -- f32 accumulate, tanh in act_dtype (bf16 on v6e/v7x).
    acc1 = jnp.dot(xq, w1_ref[...], preferred_element_type=jnp.float32) + b1_ref[...]
    h = jnp.tanh(acc1.astype(act_dtype))
    # Decoder: h @ W2 + b2.
    acc2 = jnp.dot(h.astype(w2_ref.dtype), w2_ref[...],
                   preferred_element_type=jnp.float32) + b2_ref[...]
    y = jnp.tanh(acc2.astype(act_dtype))
    o_ref[...] = y.astype(o_ref.dtype)


def prepare_params(w1, b1, w2, b2, *, matmul_dtype=jnp.bfloat16):
    """Cast/reshape parameters ONCE (hoisted out of the per-call path).

    w1: [D, H], w2: [H, D]. Biases stay f32 (added after f32 accumulation) and
    are reshaped to lane-dense (1, F). Pass matmul_dtype=jnp.float32 to keep a
    full-precision MXU path (accuracy/perf knob).
    """
    D, H = w1.shape
    assert w2.shape == (H, D) and b1.shape == (H,) and b2.shape == (D,)
    return (w1.astype(matmul_dtype),
            b1.reshape(1, H).astype(jnp.float32),
            w2.astype(matmul_dtype),
            b2.reshape(1, D).astype(jnp.float32))


def _hw_info():
    """Best-effort generation query; conservative fallbacks if unavailable."""
    kind = ""
    try:
        kind = jax.devices()[0].device_kind.lower()
    except Exception:
        pass
    vmem_physical = None
    try:
        vmem_physical = int(pltpu.get_tpu_info().vmem_capacity_bytes)
    except Exception:
        vmem_physical = None
    if not vmem_physical:
        # v7x: 64 MiB per TensorCore; v5e/v6e (and older): 128 MiB.
        vmem_physical = (64 << 20) if "7" in kind else (128 << 20)
    # Default scoped-VMEM limit the compiler applies when we say nothing.
    default_scoped = (16 << 20) if "v5" in kind else (32 << 20)
    # bf16 VPU/EUP exist on v6e/v7x; keep f32 tanh on v5e / unknown chips.
    bf16_act = ("v6" in kind) or ("7" in kind)
    return kind, vmem_physical, default_scoped, bf16_act


def _working_set_bytes(tile_b, D, H, x_bytes, out_bytes, mm_bytes, act_bytes,
                       n_weight_bufs=1):
    """Per-TC VMEM estimate for one grid step (includes kernel intermediates)."""
    streamed = 2 * tile_b * D * (x_bytes + out_bytes)        # double-buffered x/out tiles
    resident = n_weight_bufs * ((D * H + H * D) * mm_bytes + (H + D) * 4)
    intermediates = tile_b * (
        D * mm_bytes          # in-kernel cast of the x tile
        + H * 4               # encoder f32 accumulator
        + H * act_bytes       # h after tanh
        + H * mm_bytes        # h cast for the decoder MXU
        + D * 4               # decoder f32 accumulator
        + D * act_bytes       # y before the output cast
    )
    return streamed + resident + intermediates


_TILE_CANDIDATES = (1024, 512, 256, 128)


def _pick_tile_b(B, fits):
    # Small/medium batch: a single full-batch step (no per-step overhead).
    if B <= _TILE_CANDIDATES[0] and fits(B):
        return B
    # Large batch: biggest 128-multiple tile that fits the VMEM budget
    # (512-1024 is the measured HBM-roofline sweet spot); this naturally gives
    # >=2 grid steps so the batch axis stays megacore-shardable on v7x.
    for t in _TILE_CANDIDATES:
        if fits(t):
            return t
    return _TILE_CANDIDATES[-1]   # weights dominate VMEM; see K-tiling TODO


def _build_call(B_pad, D, H, tile_b, out_dtype, act_dtype, vmem_limit, cost,
                single_buffer_resident):
    if single_buffer_resident:
        # These blocks' index_map never changes across grid steps; one buffer
        # is enough (a second pipeline buffer is pure VMEM waste).
        def _resident_spec(shape):
            return pl.BlockSpec(shape, lambda i: (0, 0),
                                pipeline_mode=pl.Buffered(1))
    else:
        def _resident_spec(shape):
            return pl.BlockSpec(shape, lambda i: (0, 0))

    kernel = functools.partial(shallow_ae_kernel, act_dtype=act_dtype)
    return pl.pallas_call(
        kernel,
        out_shape=jax.ShapeDtypeStruct((B_pad, D), out_dtype),
        grid_spec=pltpu.PrefetchScalarGridSpec(
            num_scalar_prefetch=0,
            grid=(B_pad // tile_b,),
            in_specs=[
                pl.BlockSpec((tile_b, D), lambda i: (i, 0)),   # x tile (streamed)
                _resident_spec((D, H)),                        # W1 (resident)
                _resident_spec((1, H)),                        # b1
                _resident_spec((H, D)),                        # W2 (resident)
                _resident_spec((1, D)),                        # b2
            ],
            out_specs=pl.BlockSpec((tile_b, D), lambda i: (i, 0)),
        ),
        compiler_params=pltpu.CompilerParams(
            dimension_semantics=("parallel",),   # batch axis: megacore-shardable
            vmem_limit_bytes=vmem_limit,
        ),
        cost_estimate=cost,
    )


def shallow_ae(x, params, *, tile_b=None, out_dtype=None):
    w1q, b1_2d, w2q, b2_2d = params
    B, D = x.shape
    H = w1q.shape[1]
    assert w1q.shape == (D, H) and w2q.shape == (H, D)

    out_dtype = x.dtype if out_dtype is None else jnp.dtype(out_dtype)
    x_bytes = jnp.dtype(x.dtype).itemsize
    out_bytes = jnp.dtype(out_dtype).itemsize
    mm_bytes = jnp.dtype(w1q.dtype).itemsize

    _, vmem_physical, default_scoped, bf16_act = _hw_info()
    act_dtype = jnp.bfloat16 if bf16_act else jnp.float32
    act_bytes = jnp.dtype(act_dtype).itemsize

    vmem_cap = max(vmem_physical - (12 << 20), 16 << 20)  # headroom for compiler temps
    budget = int(vmem_cap * 0.75)

    def fits(tb):
        return _working_set_bytes(tb, D, H, x_bytes, out_bytes,
                                  mm_bytes, act_bytes) <= budget

    if tile_b is None:
        tile_b = _pick_tile_b(B, fits)

    # Ragged batch: zero-pad to a tile multiple (keeps the pipelined multi-step
    # path and predictable VMEM instead of one giant full-batch step).
    B_pad = -(-B // tile_b) * tile_b
    x_in = x if B_pad == B else jnp.pad(x, ((0, B_pad - B), (0, 0)))

    vmem_needed = _working_set_bytes(tile_b, D, H, x_bytes, out_bytes,
                                     mm_bytes, act_bytes)
    vmem_limit = None
    if vmem_needed > default_scoped:
        vmem_limit = min(max(int(vmem_needed * 1.25) + (4 << 20), 32 << 20),
                         vmem_cap)

    cost = pl.CostEstimate(
        flops=4 * B_pad * D * H,             # two matmuls, 2*B*D*H flops each
        transcendentals=B_pad * (H + D),     # two tanh passes
        bytes_accessed=(B_pad * D * x_bytes
                        + (D * H + H * D) * mm_bytes
                        + (H + D) * 4
                        + B_pad * D * out_bytes),
    )

    def _run(single_buffer_resident):
        call = _build_call(B_pad, D, H, tile_b, out_dtype, act_dtype,
                           vmem_limit, cost, single_buffer_resident)
        return call(x_in, w1q, b1_2d, w2q, b2_2d)

    try:
        out = _run(True)
    except Exception:
        # Graceful fallback if this jax version rejects pl.Buffered(1) on the
        # main pallas_call pipeline: double-buffer the resident weight blocks.
        out = _run(False)

    return out if B_pad == B else out[:B]


if __name__ == "__main__":
    # Small shapes consistent with ShallowAE(input_size, hl1).
    batch = 16
    input_size = 256
    hl1 = 128

    key = jax.random.PRNGKey(0)
    kx, kw1, kb1, kw2, kb2 = jax.random.split(key, 5)

    x = jax.random.normal(kx, (batch, input_size), dtype=jnp.float32)
    # Deterministic synthetic parameters (nn.Linear-style uniform ranges).
    lim1 = 1.0 / (input_size ** 0.5)
    lim2 = 1.0 / (hl1 ** 0.5)
    w1 = jax.random.uniform(kw1, (input_size, hl1), jnp.float32, -lim1, lim1)
    b1 = jax.random.uniform(kb1, (hl1,), jnp.float32, -lim1, lim1)
    w2 = jax.random.uniform(kw2, (hl1, input_size), jnp.float32, -lim2, lim2)
    b2 = jax.random.uniform(kb2, (input_size,), jnp.float32, -lim2, lim2)

    params = prepare_params(w1, b1, w2, b2)   # one-time bf16 weight cast
    out = shallow_ae(x, params)
    out = jax.block_until_ready(out)

    # Pure-JAX f32 reference of the forward semantics. Tolerance reflects the
    # documented bf16-MXU (+ bf16 tanh on v6e/v7x) accuracy/perf knob.
    ref = jnp.tanh(jnp.tanh(x @ w1 + b1) @ w2 + b2)
    assert out.shape == (batch, input_size)
    err = float(jnp.max(jnp.abs(out - ref)))
    assert jnp.allclose(out, ref, atol=2.5e-2, rtol=2.5e-2), f"max abs err {err}"

    print("KERNEL_OK")
</pallas_src>

<mosaic_0001>
module attributes {stable_mosaic.version = 11 : i64} {
  func.func @shallow_ae_kernel(%arg0: i32, %arg1: memref<16x256xf32, #tpu.memory_space<vmem>>, %arg2: memref<256x128xbf16, #tpu.memory_space<vmem>>, %arg3: memref<1x128xf32, #tpu.memory_space<vmem>>, %arg4: memref<128x256xbf16, #tpu.memory_space<vmem>>, %arg5: memref<1x256xf32, #tpu.memory_space<vmem>>, %arg6: memref<16x256xf32, #tpu.memory_space<vmem>>) attributes {dimension_semantics = [#tpu.dimension_semantics<parallel>], iteration_bounds = array<i64: 1>, scalar_prefetch = 0 : i64, scratch_operands = 0 : i64, tpu.core_type = #tpu.core_type<tc>, window_params = [{transform_indices = @transform_0, window_bounds = array<i64: 16, 256>}, {pipeline_mode = #tpu.pipeline_mode<synchronous>, transform_indices = @transform_1, window_bounds = array<i64: 256, 128>}, {pipeline_mode = #tpu.pipeline_mode<synchronous>, transform_indices = @transform_2, window_bounds = array<i64: 1, 128>}, {pipeline_mode = #tpu.pipeline_mode<synchronous>, transform_indices = @transform_3, window_bounds = array<i64: 128, 256>}, {pipeline_mode = #tpu.pipeline_mode<synchronous>, transform_indices = @transform_4, window_bounds = array<i64: 1, 256>}, {transform_indices = @transform_5, window_bounds = array<i64: 16, 256>}]} {
    %c0 = arith.constant 0 : index
    %c0_0 = arith.constant 0 : index
    %0 = vector.load %arg1[%c0, %c0_0] : memref<16x256xf32, #tpu.memory_space<vmem>>, vector<16x256xf32>
    %1 = arith.truncf %0 : vector<16x256xf32> to vector<16x256xbf16>
    %c0_1 = arith.constant 0 : index
    %c0_2 = arith.constant 0 : index
    %2 = vector.load %arg2[%c0_1, %c0_2] : memref<256x128xbf16, #tpu.memory_space<vmem>>, vector<256x128xbf16>
    %cst = arith.constant dense<0.000000e+00> : vector<16x128xf32>
    %3 = tpu.matmul %1, %2, %cst {dimension_numbers = #tpu.dot_dimension_numbers<[1], [0], [0], [1], [0, 0, 1, 1], [], []>} : vector<16x256xbf16>, vector<256x128xbf16>, vector<16x128xf32> -> vector<16x128xf32>
    %c0_3 = arith.constant 0 : index
    %c0_4 = arith.constant 0 : index
    %4 = vector.load %arg3[%c0_3, %c0_4] : memref<1x128xf32, #tpu.memory_space<vmem>>, vector<1x128xf32>
    %5 = vector.broadcast %4 : vector<1x128xf32> to vector<16x128xf32>
    %6 = arith.addf %3, %5 : vector<16x128xf32>
    %7 = math.tanh %6 : vector<16x128xf32>
    %8 = arith.truncf %7 : vector<16x128xf32> to vector<16x128xbf16>
    %c0_5 = arith.constant 0 : index
    %c0_6 = arith.constant 0 : index
    %9 = vector.load %arg4[%c0_5, %c0_6] : memref<128x256xbf16, #tpu.memory_space<vmem>>, vector<128x256xbf16>
    %cst_7 = arith.constant dense<0.000000e+00> : vector<16x256xf32>
    %10 = tpu.matmul %8, %9, %cst_7 {dimension_numbers = #tpu.dot_dimension_numbers<[1], [0], [0], [1], [0, 0, 1, 1], [], []>} : vector<16x128xbf16>, vector<128x256xbf16>, vector<16x256xf32> -> vector<16x256xf32>
    %c0_8 = arith.constant 0 : index
    %c0_9 = arith.constant 0 : index
    %11 = vector.load %arg5[%c0_8, %c0_9] : memref<1x256xf32, #tpu.memory_space<vmem>>, vector<1x256xf32>
    %12 = vector.broadcast %11 : vector<1x256xf32> to vector<16x256xf32>
    %13 = arith.addf %10, %12 : vector<16x256xf32>
    %14 = math.tanh %13 : vector<16x256xf32>
    %c0_10 = arith.constant 0 : index
    %c0_11 = arith.constant 0 : index
    %15 = vector.load %arg6[%c0_10, %c0_11] : memref<16x256xf32, #tpu.memory_space<vmem>>, vector<16x256xf32>
    tpu.vector_store %arg6[%c0_10, %c0_11], %14 {strides = array<i32>} : memref<16x256xf32, #tpu.memory_space<vmem>>, vector<16x256xf32>,
    return
  }
  func.func @transform_0(%arg0: i32) -> (i32, i32) {
    %c0_i32 = arith.constant 0 : i32
    %c0_i32_0 = arith.constant 0 : i32
    return %arg0, %c0_i32 : i32, i32
  }
  func.func @transform_1(%arg0: i32) -> (i32, i32) {
    %c0_i32 = arith.constant 0 : i32
    %c0_i32_0 = arith.constant 0 : i32
    %c0_i32_1 = arith.constant 0 : i32
    return %c0_i32, %c0_i32_0 : i32, i32
  }
  func.func @transform_2(%arg0: i32) -> (i32, i32) {
    %c0_i32 = arith.constant 0 : i32
    %c0_i32_0 = arith.constant 0 : i32
    %c0_i32_1 = arith.constant 0 : i32
    return %c0_i32, %c0_i32_0 : i32, i32
  }
  func.func @transform_3(%arg0: i32) -> (i32, i32) {
    %c0_i32 = arith.constant 0 : i32
    %c0_i32_0 = arith.constant 0 : i32
    %c0_i32_1 = arith.constant 0 : i32
    return %c0_i32, %c0_i32_0 : i32, i32
  }
  func.func @transform_4(%arg0: i32) -> (i32, i32) {
    %c0_i32 = arith.constant 0 : i32
    %c0_i32_0 = arith.constant 0 : i32
    %c0_i32_1 = arith.constant 0 : i32
    return %c0_i32, %c0_i32_0 : i32, i32
  }
  func.func @transform_5(%arg0: i32) -> (i32, i32) {
    %c0_i32 = arith.constant 0 : i32
    %c0_i32_0 = arith.constant 0 : i32
    return %arg0, %c0_i32 : i32, i32
  }
}

module attributes {stable_mosaic.version = 11 : i64} {
  func.func @shallow_ae_kernel(%arg0: i32, %arg1: memref<16x256xf32, #tpu.memory_space<vmem>>, %arg2: memref<256x128xbf16, #tpu.memory_space<vmem>>, %arg3: memref<1x128xf32, #tpu.memory_space<vmem>>, %arg4: memref<128x256xbf16, #tpu.memory_space<vmem>>, %arg5: memref<1x256xf32, #tpu.memory_space<vmem>>, %arg6: memref<16x256xf32, #tpu.memory_space<vmem>>) attributes {dimension_semantics = [#tpu.dimension_semantics<parallel>], iteration_bounds = array<i64: 1>, scalar_prefetch = 0 : i64, scratch_operands = 0 : i64, tpu.core_type = #tpu.core_type<tc>, window_params = [{transform_indices = @transform_0, window_bounds = array<i64: 16, 256>}, {pipeline_mode = #tpu.pipeline_mode<synchronous>, transform_indices = @transform_1, window_bounds = array<i64: 256, 128>}, {pipeline_mode = #tpu.pipeline_mode<synchronous>, transform_indices = @transform_2, window_bounds = array<i64: 1, 128>}, {pipeline_mode = #tpu.pipeline_mode<synchronous>, transform_indices = @transform_3, window_bounds = array<i64: 128, 256>}, {pipeline_mode = #tpu.pipeline_mode<synchronous>, transform_indices = @transform_4, window_bounds = array<i64: 1, 256>}, {transform_indices = @transform_5, window_bounds = array<i64: 16, 256>}]} {
    %c0 = arith.constant 0 : index
    %c0_0 = arith.constant 0 : index
    %0 = vector.load %arg1[%c0, %c0_0] : memref<16x256xf32, #tpu.memory_space<vmem>>, vector<16x256xf32>
    %1 = arith.truncf %0 : vector<16x256xf32> to vector<16x256xbf16>
    %c0_1 = arith.constant 0 : index
    %c0_2 = arith.constant 0 : index
    %2 = vector.load %arg2[%c0_1, %c0_2] : memref<256x128xbf16, #tpu.memory_space<vmem>>, vector<256x128xbf16>
    %cst = arith.constant dense<0.000000e+00> : vector<16x128xf32>
    %3 = tpu.matmul %1, %2, %cst {dimension_numbers = #tpu.dot_dimension_numbers<[1], [0], [0], [1], [0, 0, 1, 1], [], []>} : vector<16x256xbf16>, vector<256x128xbf16>, vector<16x128xf32> -> vector<16x128xf32>
    %c0_3 = arith.constant 0 : index
    %c0_4 = arith.constant 0 : index
    %4 = vector.load %arg3[%c0_3, %c0_4] : memref<1x128xf32, #tpu.memory_space<vmem>>, vector<1x128xf32>
    %5 = vector.broadcast %4 : vector<1x128xf32> to vector<16x128xf32>
    %6 = arith.addf %3, %5 : vector<16x128xf32>
    %7 = math.tanh %6 : vector<16x128xf32>
    %8 = arith.truncf %7 : vector<16x128xf32> to vector<16x128xbf16>
    %c0_5 = arith.constant 0 : index
    %c0_6 = arith.constant 0 : index
    %9 = vector.load %arg4[%c0_5, %c0_6] : memref<128x256xbf16, #tpu.memory_space<vmem>>, vector<128x256xbf16>
    %cst_7 = arith.constant dense<0.000000e+00> : vector<16x256xf32>
    %10 = tpu.matmul %8, %9, %cst_7 {dimension_numbers = #tpu.dot_dimension_numbers<[1], [0], [0], [1], [0, 0, 1, 1], [], []>} : vector<16x128xbf16>, vector<128x256xbf16>, vector<16x256xf32> -> vector<16x256xf32>
    %c0_8 = arith.constant 0 : index
    %c0_9 = arith.constant 0 : index
    %11 = vector.load %arg5[%c0_8, %c0_9] : memref<1x256xf32, #tpu.memory_space<vmem>>, vector<1x256xf32>
    %12 = vector.broadcast %11 : vector<1x256xf32> to vector<16x256xf32>
    %13 = arith.addf %10, %12 : vector<16x256xf32>
    %14 = math.tanh %13 : vector<16x256xf32>
    %c0_10 = arith.constant 0 : index
    %c0_11 = arith.constant 0 : index
    %15 = vector.load %arg6[%c0_10, %c0_11] : memref<16x256xf32, #tpu.memory_space<vmem>>, vector<16x256xf32>
    tpu.vector_store %arg6[%c0_10, %c0_11], %14 {strides = array<i32>} : memref<16x256xf32, #tpu.memory_space<vmem>>, vector<16x256xf32>,
    return
  }
  func.func @transform_0(%arg0: i32) -> (i32, i32) {
    %c0_i32 = arith.constant 0 : i32
    %c0_i32_0 = arith.constant 0 : i32
    return %arg0, %c0_i32 : i32, i32
  }
  func.func @transform_1(%arg0: i32) -> (i32, i32) {
    %c0_i32 = arith.constant 0 : i32
    %c0_i32_0 = arith.constant 0 : i32
    %c0_i32_1 = arith.constant 0 : i32
    return %c0_i32, %c0_i32_0 : i32, i32
  }
  func.func @transform_2(%arg0: i32) -> (i32, i32) {
    %c0_i32 = arith.constant 0 : i32
    %c0_i32_0 = arith.constant 0 : i32
    %c0_i32_1 = arith.constant 0 : i32
    return %c0_i32, %c0_i32_0 : i32, i32
  }
  func.func @transform_3(%arg0: i32) -> (i32, i32) {
    %c0_i32 = arith.constant 0 : i32
    %c0_i32_0 = arith.constant 0 : i32
    %c0_i32_1 = arith.constant 0 : i32
    return %c0_i32, %c0_i32_0 : i32, i32
  }
  func.func @transform_4(%arg0: i32) -> (i32, i32) {
    %c0_i32 = arith.constant 0 : i32
    %c0_i32_0 = arith.constant 0 : i32
    %c0_i32_1 = arith.constant 0 : i32
    return %c0_i32, %c0_i32_0 : i32, i32
  }
  func.func @transform_5(%arg0: i32) -> (i32, i32) {
    %c0_i32 = arith.constant 0 : i32
    %c0_i32_0 = arith.constant 0 : i32
    return %arg0, %c0_i32 : i32, i32
  }
}

</mosaic_0001>

<llo_original>
// kernel: tpu_custom_call.1
$region0: #{tpu_custom_call.1}
  #allocation0 [shape = 'u32[]', space=smem, size = 0x4, offset = 0x4, fixed_abs, tag = 'smem constant byte address 0x4 - core index']
  #allocation1 [shape = 'u32[72,128]{1,0:T(1,128)}', space=vmem, size = 0x9000, scoped, tag = 'internal scratch']
  %s0 = inlined_call_operand.hbm [shape: f32[16,256], index: 0, kind: input, shape index: {}]
  %s1 = inlined_call_operand.hbm [shape: bf16[256,128], index: 1, kind: input, shape index: {}]
  %s2 = inlined_call_operand.vmem [shape: f32[1,128], index: 2, kind: input, shape index: {}]
  %s3 = inlined_call_operand.hbm [shape: bf16[128,256], index: 3, kind: input, shape index: {}]
  %s4 = inlined_call_operand.vmem [shape: f32[1,256], index: 4, kind: input, shape index: {}]
  %s5 = inlined_call_operand.hbm [shape: f32[16,256], index: 5, kind: output, shape index: {}]
  %s6 = sld [smem:[#allocation0]]
  $region42: #{tpu_custom_call.1} parent=0
    _
  %s8 = ssub.s32 1, %s6
  %s9 = scalar_select 0, %s8, %s6
  $region1: #{tpu_custom_call.1} parent=0
    #allocation2 [shape = 'u8[16384]{0}', space=vmem, size = 0x4000, scoped, tag = 'input window, operand 0, single buffered']
    #allocation3 [shape = 's32[1]{0}', space=sflag, size = 0x4, scoped, tag = 'scoped memory for tpu_custom_call.1']
    #allocation4 [shape = 's32[1]{0}', space=sflag, size = 0x4, scoped, tag = 'scoped memory for tpu_custom_call.1']
    #allocation5 [shape = 'u8[65536]{0}', space=vmem, size = 0x10000, scoped, tag = 'input window, operand 1, single buffered']
    #allocation6 [shape = 's32[1]{0}', space=sflag, size = 0x4, scoped, tag = 'scoped memory for tpu_custom_call.1']
    #allocation7 [shape = 'u8[65536]{0}', space=vmem, size = 0x10000, scoped, tag = 'input window, operand 3, single buffered']
    #allocation8 [shape = 'u8[16384]{0}', space=vmem, size = 0x4000, scoped, tag = 'output window, operand 0, single buffered']
    %10 = vsyncpa [#allocation3], 0
    %11 = vsyncpa [#allocation6], 0
    %12 = vsyncpa [#allocation4], 0
    // Predicated region
    $region2: #{tpu_custom_call.1} parent=1 // pred_check
      _
    $region3: #{tpu_custom_call.1} parent=1 // pred_check_branch
      %14 = sbr.rel (0) target = $region5
    $region4: #{tpu_custom_call.1} parent=1 // pred_region
      %16 = vsyncadd [#allocation3], 0
      %s17 = sshll.u32 %s0, 4
      %s18 = int_to_ptr.hbm [resolvable:$true] %s17
      %s19 = sshll.u32 [#allocation2], 4
      %s20 = int_to_ptr.vmem [resolvable:$true] %s19
      %25 = dma.hbm_to_vmem [thread:$0]  %s18, 512, %s20, [#allocation3], 256, 256, 16
    $region5: #{tpu_custom_call.1} parent=1 // pred_fallthru
      _
    // Predicated region
    $region6: #{tpu_custom_call.1} parent=1 // pred_check
      _
    $region7: #{tpu_custom_call.1} parent=1 // pred_check_branch
      %27 = sbr.rel (0) target = $region9
    $region8: #{tpu_custom_call.1} parent=1 // pred_region
      %29 = vsyncadd [#allocation6], 0
      %s30 = sshll.u32 %s1, 4
      %s31 = int_to_ptr.hbm [resolvable:$true] %s30
      %s32 = sshll.u32 [#allocation5], 4
      %s33 = int_to_ptr.vmem [resolvable:$true] %s32
      %38 = dma.hbm_to_vmem [thread:$0]  %s31, 2048, %s33, [#allocation6], 64, 64, 4
    $region9: #{tpu_custom_call.1} parent=1 // pred_fallthru
      _
    // Predicated region
    $region10: #{tpu_custom_call.1} parent=1 // pred_check
      _
    $region11: #{tpu_custom_call.1} parent=1 // pred_check_branch
      %40 = sbr.rel (0) target = $region13
    $region12: #{tpu_custom_call.1} parent=1 // pred_region
      _
    $region13: #{tpu_custom_call.1} parent=1 // pred_fallthru
      _
    // Predicated region
    $region14: #{tpu_custom_call.1} parent=1 // pred_check
      _
    $region15: #{tpu_custom_call.1} parent=1 // pred_check_branch
      %42 = sbr.rel (0) target = $region17
    $region16: #{tpu_custom_call.1} parent=1 // pred_region
      %44 = vsyncadd [#allocation6], 0
      %s45 = sshll.u32 %s3, 4
      %s46 = int_to_ptr.hbm [resolvable:$true] %s45
      %s47 = sshll.u32 [#allocation7], 4
      %s48 = int_to_ptr.vmem [resolvable:$true] %s47
      %53 = dma.hbm_to_vmem [thread:$0]  %s46, 2048, %s48, [#allocation6], 128, 128, 8
    $region17: #{tpu_custom_call.1} parent=1 // pred_fallthru
      _
    // Predicated region
    $region18: #{tpu_custom_call.1} parent=1 // pred_check
      _
    $region19: #{tpu_custom_call.1} parent=1 // pred_check_branch
      %55 = sbr.rel (0) target = $region21
    $region20: #{tpu_custom_call.1} parent=1 // pred_region
      _
    $region21: #{tpu_custom_call.1} parent=1 // pred_fallthru
      _
    // Predicated region
    $region22: #{tpu_custom_call.1} parent=1 // pred_check
      _
    $region23: #{tpu_custom_call.1} parent=1 // pred_check_branch
      %57 = sbr.rel (0) target = $region25
    $region24: #{tpu_custom_call.1} parent=1 // pred_region
      %59 = dma.done [#allocation3], 512
    $region25: #{tpu_custom_call.1} parent=1 // pred_fallthru
      _
    // Predicated region
    $region26: #{tpu_custom_call.1} parent=1 // pred_check
      _
    $region27: #{tpu_custom_call.1} parent=1 // pred_check_branch
      %61 = sbr.rel (0) target = $region29
    $region28: #{tpu_custom_call.1} parent=1 // pred_region
      %63 = dma.done [#allocation6], 2048
    $region29: #{tpu_custom_call.1} parent=1 // pred_fallthru
      _
    // Predicated region
    $region30: #{tpu_custom_call.1} parent=1 // pred_check
      _
    $region31: #{tpu_custom_call.1} parent=1 // pred_check_branch
      %65 = sbr.rel (0) target = $region33
    $region32: #{tpu_custom_call.1} parent=1 // pred_region
      %67 = dma.done [#allocation6], 2048
    $region33: #{tpu_custom_call.1} parent=1 // pred_fallthru
      _
    %v68 = vld [vmem:[#allocation2] sm:$0xff]
    %v69 = vld [vmem:[#allocation2 + $0x8] sm:$0xff]
    %v70 = vld [vmem:[#allocation2 + $0x10] sm:$0xff]
    %v71 = vld [vmem:[#allocation2 + $0x18] sm:$0xff]
    %v72 = vpack.c.bf16 %v70, %v68
    %v73 = vpack.c.bf16 %v71, %v69
    %v74 = vld [vmem:[#allocation5] sm:$0xf]
    %v75 = vld [vmem:[#allocation5 + $0x4] sm:$0xf]
    %v76 = vld [vmem:[#allocation5 + $0x8] sm:$0xf]
    %v77 = vld [vmem:[#allocation5 + $0xc] sm:$0xf]
    %v78 = vld [vmem:[#allocation5 + $0x10] sm:$0xf]
    %v79 = vld [vmem:[#allocation5 + $0x14] sm:$0xf]
    %v80 = vld [vmem:[#allocation5 + $0x18] sm:$0xf]
    %v81 = vld [vmem:[#allocation5 + $0x1c] sm:$0xf]
    %v82 = vld [vmem:[#allocation5 + $0x20] sm:$0xf]
    %v83 = vld [vmem:[#allocation5 + $0x24] sm:$0xf]
    %v84 = vld [vmem:[#allocation5 + $0x28] sm:$0xf]
    %v85 = vld [vmem:[#allocation5 + $0x2c] sm:$0xf]
    %v86 = vld [vmem:[#allocation5 + $0x30] sm:$0xf]
    %v87 = vld [vmem:[#allocation5 + $0x34] sm:$0xf]
    %v88 = vld [vmem:[#allocation5 + $0x38] sm:$0xf]
    %v89 = vld [vmem:[#allocation5 + $0x3c] sm:$0xf]
    %v90 = vld [vmem:[#allocation5 + $0x40] sm:$0xf]
    %v91 = vld [vmem:[#allocation5 + $0x44] sm:$0xf]
    %v92 = vld [vmem:[#allocation5 + $0x48] sm:$0xf]
    %v93 = vld [vmem:[#allocation5 + $0x4c] sm:$0xf]
    %v94 = vld [vmem:[#allocation5 + $0x50] sm:$0xf]
    %v95 = vld [vmem:[#allocation5 + $0x54] sm:$0xf]
    %v96 = vld [vmem:[#allocation5 + $0x58] sm:$0xf]
    %v97 = vld [vmem:[#allocation5 + $0x5c] sm:$0xf]
    %v98 = vld [vmem:[#allocation5 + $0x60] sm:$0xf]
    %v99 = vld [vmem:[#allocation5 + $0x64] sm:$0xf]
    %v100 = vld [vmem:[#allocation5 + $0x68] sm:$0xf]
    %v101 = vld [vmem:[#allocation5 + $0x6c] sm:$0xf]
    %v102 = vld [vmem:[#allocation5 + $0x70] sm:$0xf]
    %v103 = vld [vmem:[#allocation5 + $0x74] sm:$0xf]
    %v104 = vld [vmem:[#allocation5 + $0x78] sm:$0xf]
    %v105 = vld [vmem:[#allocation5 + $0x7c] sm:$0xf]
    %v106 = vld [vmem:[%s2] sm:$0x1]
    %v108 = vperm.slane %v106, 0
    %v142 = vunpack.c.l.b16 %v74
    %v143 = vunpack.c.l.b16 %v75
    %v144 = vunpack.c.l.b16 %v76
    %v145 = vunpack.c.l.b16 %v77
    %v146 = vunpack.c.l.b16 %v78
    %v147 = vunpack.c.l.b16 %v79
    %v148 = vunpack.c.l.b16 %v80
    %v149 = vunpack.c.l.b16 %v81
    %v150 = vunpack.c.l.b16 %v82
    %v151 = vunpack.c.l.b16 %v83
    %v152 = vunpack.c.l.b16 %v84
    %v153 = vunpack.c.l.b16 %v85
    %v154 = vunpack.c.l.b16 %v86
    %v155 = vunpack.c.l.b16 %v87
    %v156 = vunpack.c.l.b16 %v88
    %v157 = vunpack.c.l.b16 %v89
    %v158 = vunpack.c.l.b16 %v90
    %v159 = vunpack.c.l.b16 %v91
    %v160 = vunpack.c.l.b16 %v92
    %v161 = vunpack.c.l.b16 %v93
    %v162 = vunpack.c.l.b16 %v94
    %v163 = vunpack.c.l.b16 %v95
    %v164 = vunpack.c.l.b16 %v96
    %v165 = vunpack.c.l.b16 %v97
    %v166 = vunpack.c.l.b16 %v98
    %v167 = vunpack.c.l.b16 %v99
    %v168 = vunpack.c.l.b16 %v100
    %v169 = vunpack.c.l.b16 %v101
    %v170 = vunpack.c.l.b16 %v102
    %v171 = vunpack.c.l.b16 %v103
    %v172 = vunpack.c.l.b16 %v104
    %v173 = vunpack.c.l.b16 %v105
    %v174 = vpack.c.b16 %v143, %v142
    %v175 = vpack.c.b16 %v145, %v144
    %v176 = vpack.c.b16 %v147, %v146
    %v177 = vpack.c.b16 %v149, %v148
    %v178 = vpack.c.b16 %v151, %v150
    %v179 = vpack.c.b16 %v153, %v152
    %v180 = vpack.c.b16 %v155, %v154
    %v181 = vpack.c.b16 %v157, %v156
    %v182 = vpack.c.b16 %v159, %v158
    %v183 = vpack.c.b16 %v161, %v160
    %v184 = vpack.c.b16 %v163, %v162
    %v185 = vpack.c.b16 %v165, %v164
    %v186 = vpack.c.b16 %v167, %v166
    %v187 = vpack.c.b16 %v169, %v168
    %v188 = vpack.c.b16 %v171, %v170
    %v189 = vpack.c.b16 %v173, %v172
    %206 = vmatpush.bf16.msra.mxu0 %v181
    %207 = vmatpush.bf16.msra.mxu0 %v180
    %208 = vmatpush.bf16.msra.mxu0 %v179
    %209 = vmatpush.bf16.msra.mxu0 %v178
    %210 = vmatpush.bf16.msra.mxu0 %v177
    %211 = vmatpush.bf16.msra.mxu0 %v176
    %212 = vmatpush.bf16.msra.mxu0 %v175
    %213 = vmatpush.bf16.msra.mxu0 %v174
    %214 = vmatmul.bf16.gmra.mxu0 %v72
    %v215 = vpop.f32.mrf.mxu0
    %v216 = vadd.f32 %v108, %v215
    %v217 = vpop.f32.mrf.mxu0
    %v218 = vadd.f32 %v108, %v217
    %219 = vdwg.mxu0
    %220 = vmatpush.bf16.msra.mxu0 %v189
    %221 = vmatpush.bf16.msra.mxu0 %v188
    %222 = vmatpush.bf16.msra.mxu0 %v187
    %223 = vmatpush.bf16.msra.mxu0 %v186
    %224 = vmatpush.bf16.msra.mxu0 %v185
    %225 = vmatpush.bf16.msra.mxu0 %v184
    %226 = vmatpush.bf16.msra.mxu0 %v183
    %227 = vmatpush.bf16.msra.mxu0 %v182
    %228 = vmatmul.bf16.gmra.mxu0 %v73
    %v229 = vpop.f32.mrf.mxu0
    %v230 = vadd.f32 %v216, %v229
    %v231 = vpop.f32.mrf.mxu0
    %v232 = vadd.f32 %v218, %v231
    %233 = vdwg.mxu0
    %v234 = vtanh.pop %v230
    %v235 = vtanh.pop %v232
    %v236 = vpack.c.bf16 %v235, %v234
    %v237 = vld [vmem:[#allocation7] sm:$0xff]
    %v238 = vld [vmem:[#allocation7 + $0x8] sm:$0xff]
    %v239 = vld [vmem:[#allocation7 + $0x10] sm:$0xff]
    %v240 = vld [vmem:[#allocation7 + $0x18] sm:$0xff]
    %v241 = vld [vmem:[#allocation7 + $0x20] sm:$0xff]
    %v242 = vld [vmem:[#allocation7 + $0x28] sm:$0xff]
    %v243 = vld [vmem:[#allocation7 + $0x30] sm:$0xff]
    %v244 = vld [vmem:[#allocation7 + $0x38] sm:$0xff]
    %v245 = vld [vmem:[#allocation7 + $0x40] sm:$0xff]
    %v246 = vld [vmem:[#allocation7 + $0x48] sm:$0xff]
    %v247 = vld [vmem:[#allocation7 + $0x50] sm:$0xff]
    %v248 = vld [vmem:[#allocation7 + $0x58] sm:$0xff]
    %v249 = vld [vmem:[#allocation7 + $0x60] sm:$0xff]
    %v250 = vld [vmem:[#allocation7 + $0x68] sm:$0xff]
    %v251 = vld [vmem:[#allocation7 + $0x70] sm:$0xff]
    %v252 = vld [vmem:[#allocation7 + $0x78] sm:$0xff]
    %v253 = vld [vmem:[%s4] sm:$0x3]
    %v255 = vperm.slane %v253, 0
    %v256 = vperm.slane %v253, 1
    %v275 = vunpack.c.l.b16 %v237
    %v276 = vunpack.c.h.b16 %v237
    %v277 = vunpack.c.l.b16 %v238
    %v278 = vunpack.c.h.b16 %v238
    %v279 = vunpack.c.l.b16 %v239
    %v280 = vunpack.c.h.b16 %v239
    %v281 = vunpack.c.l.b16 %v240
    %v282 = vunpack.c.h.b16 %v240
    %v283 = vunpack.c.l.b16 %v241
    %v284 = vunpack.c.h.b16 %v241
    %v285 = vunpack.c.l.b16 %v242
    %v286 = vunpack.c.h.b16 %v242
    %v287 = vunpack.c.l.b16 %v243
    %v288 = vunpack.c.h.b16 %v243
    %v289 = vunpack.c.l.b16 %v244
    %v290 = vunpack.c.h.b16 %v244
    %v291 = vunpack.c.l.b16 %v245
    %v292 = vunpack.c.h.b16 %v245
    %v293 = vunpack.c.l.b16 %v246
    %v294 = vunpack.c.h.b16 %v246
    %v295 = vunpack.c.l.b16 %v247
    %v296 = vunpack.c.h.b16 %v247
    %v297 = vunpack.c.l.b16 %v248
    %v298 = vunpack.c.h.b16 %v248
    %v299 = vunpack.c.l.b16 %v249
    %v300 = vunpack.c.h.b16 %v249
    %v301 = vunpack.c.l.b16 %v250
    %v302 = vunpack.c.h.b16 %v250
    %v303 = vunpack.c.l.b16 %v251
    %v304 = vunpack.c.h.b16 %v251
    %v305 = vunpack.c.l.b16 %v252
    %v306 = vunpack.c.h.b16 %v252
    %v307 = vpack.c.b16 %v277, %v275
    %v308 = vpack.c.b16 %v278, %v276
    %v309 = vpack.c.b16 %v281, %v279
    %v310 = vpack.c.b16 %v282, %v280
    %v311 = vpack.c.b16 %v285, %v283
    %v312 = vpack.c.b16 %v286, %v284
    %v313 = vpack.c.b16 %v289, %v287
    %v314 = vpack.c.b16 %v290, %v288
    %v315 = vpack.c.b16 %v293, %v291
    %v316 = vpack.c.b16 %v294, %v292
    %v317 = vpack.c.b16 %v297, %v295
    %v318 = vpack.c.b16 %v298, %v296
    %v319 = vpack.c.b16 %v301, %v299
    %v320 = vpack.c.b16 %v302, %v300
    %v321 = vpack.c.b16 %v305, %v303
    %v322 = vpack.c.b16 %v306, %v304
    %339 = vmatpush.bf16.msra.mxu0 %v321
    %340 = vmatpush.bf16.msra.mxu0 %v319
    %341 = vmatpush.bf16.msra.mxu0 %v317
    %342 = vmatpush.bf16.msra.mxu0 %v315
    %343 = vmatpush.bf16.msra.mxu0 %v313
    %344 = vmatpush.bf16.msra.mxu0 %v311
    %345 = vmatpush.bf16.msra.mxu0 %v309
    %346 = vmatpush.bf16.msra.mxu0 %v307
    %347 = vmatmul.bf16.gmra.mxu0 %v236
    %v348 = vpop.f32.mrf.mxu0
    %v349 = vadd.f32 %v255, %v348
    %v350 = vpop.f32.mrf.mxu0
    %v351 = vadd.f32 %v255, %v350
    %352 = vdwg.mxu0
    %353 = vmatpush.bf16.msra.mxu0 %v322
    %354 = vmatpush.bf16.msra.mxu0 %v320
    %355 = vmatpush.bf16.msra.mxu0 %v318
    %356 = vmatpush.bf16.msra.mxu0 %v316
    %357 = vmatpush.bf16.msra.mxu0 %v314
    %358 = vmatpush.bf16.msra.mxu0 %v312
    %359 = vmatpush.bf16.msra.mxu0 %v310
    %360 = vmatpush.bf16.msra.mxu0 %v308
    %361 = vmatmul.bf16.gmra.mxu0 %v236
    %v362 = vpop.f32.mrf.mxu0
    %v363 = vadd.f32 %v256, %v362
    %v364 = vpop.f32.mrf.mxu0
    %v365 = vadd.f32 %v256, %v364
    %366 = vdwg.mxu0
    %v367 = vtanh.pop %v349
    %v368 = vtanh.pop %v363
    %v369 = vtanh.pop %v351
    %v370 = vtanh.pop %v365
    %371 = vst [vmem:[#allocation8] sm:$0xff] %v367
    %372 = vst [vmem:[#allocation8 + $0x8] sm:$0xff] %v368
    %373 = vst [vmem:[#allocation8 + $0x10] sm:$0xff] %v369
    %374 = vst [vmem:[#allocation8 + $0x18] sm:$0xff] %v370
    // Predicated region
    $region34: #{tpu_custom_call.1} parent=1 // pred_check
      _
    $region35: #{tpu_custom_call.1} parent=1 // pred_check_branch
      %376 = sbr.rel (0) target = $region37
    $region36: #{tpu_custom_call.1} parent=1 // pred_region
      %378 = vsyncadd [#allocation4], 0
      %s379 = sshll.u32 [#allocation8], 4
      %s380 = int_to_ptr.vmem [resolvable:$true] %s379
      %s381 = sshll.u32 %s5, 4
      %s382 = int_to_ptr.hbm [resolvable:$true] %s381
      %387 = dma.vmem_to_hbm [thread:$0]  %s380, 512, %s382, [#allocation4], 256, 256, 16
    $region37: #{tpu_custom_call.1} parent=1 // pred_fallthru
      _
    // Predicated region
    $region38: #{tpu_custom_call.1} parent=1 // pred_check
      _
    $region39: #{tpu_custom_call.1} parent=1 // pred_check_branch
      %389 = sbr.rel (0) target = $region41
    $region40: #{tpu_custom_call.1} parent=1 // pred_region
      %391 = dma.done [#allocation4], 512
    $region41: #{tpu_custom_call.1} parent=1 // pred_fallthru
      _
    %392 = vsyncpa [#allocation3], 1
    %393 = vsyncpa [#allocation6], 1
    %394 = vsyncpa [#allocation4], 1

// kernel: tpu_custom_call.1
$region0: #{tpu_custom_call.1}
  #allocation0 [shape = 'u32[]', space=smem, size = 0x4, offset = 0x4, fixed_abs, tag = 'smem constant byte address 0x4 - core index']
  #allocation1 [shape = 'u32[72,128]{1,0:T(1,128)}', space=vmem, size = 0x9000, scoped, tag = 'internal scratch']
  %s0 = inlined_call_operand.hbm [shape: f32[16,256], index: 0, kind: input, shape index: {}]
  %s1 = inlined_call_operand.hbm [shape: bf16[256,128], index: 1, kind: input, shape index: {}]
  %s2 = inlined_call_operand.vmem [shape: f32[1,128], index: 2, kind: input, shape index: {}]
  %s3 = inlined_call_operand.hbm [shape: bf16[128,256], index: 3, kind: input, shape index: {}]
  %s4 = inlined_call_operand.vmem [shape: f32[1,256], index: 4, kind: input, shape index: {}]
  %s5 = inlined_call_operand.hbm [shape: f32[16,256], index: 5, kind: output, shape index: {}]
  %s6 = sld [smem:[#allocation0]]
  $region42: #{tpu_custom_call.1} parent=0
    _
  %s8 = ssub.s32 1, %s6
  %s9 = scalar_select 0, %s8, %s6
  $region1: #{tpu_custom_call.1} parent=0
    #allocation2 [shape = 'u8[16384]{0}', space=vmem, size = 0x4000, scoped, tag = 'input window, operand 0, single buffered']
    #allocation3 [shape = 's32[1]{0}', space=sflag, size = 0x4, scoped, tag = 'scoped memory for tpu_custom_call.1']
    #allocation4 [shape = 's32[1]{0}', space=sflag, size = 0x4, scoped, tag = 'scoped memory for tpu_custom_call.1']
    #allocation5 [shape = 'u8[65536]{0}', space=vmem, size = 0x10000, scoped, tag = 'input window, operand 1, single buffered']
    #allocation6 [shape = 's32[1]{0}', space=sflag, size = 0x4, scoped, tag = 'scoped memory for tpu_custom_call.1']
    #allocation7 [shape = 'u8[65536]{0}', space=vmem, size = 0x10000, scoped, tag = 'input window, operand 3, single buffered']
    #allocation8 [shape = 'u8[16384]{0}', space=vmem, size = 0x4000, scoped, tag = 'output window, operand 0, single buffered']
    %10 = vsyncpa [#allocation3], 0
    %11 = vsyncpa [#allocation6], 0
    %12 = vsyncpa [#allocation4], 0
    // Predicated region
    $region2: #{tpu_custom_call.1} parent=1 // pred_check
      _
    $region3: #{tpu_custom_call.1} parent=1 // pred_check_branch
      %14 = sbr.rel (0) target = $region5
    $region4: #{tpu_custom_call.1} parent=1 // pred_region
      %16 = vsyncadd [#allocation3], 0
      %s17 = sshll.u32 %s0, 4
      %s18 = int_to_ptr.hbm [resolvable:$true] %s17
      %s19 = sshll.u32 [#allocation2], 4
      %s20 = int_to_ptr.vmem [resolvable:$true] %s19
      %25 = dma.hbm_to_vmem [thread:$0]  %s18, 512, %s20, [#allocation3], 256, 256, 16
    $region5: #{tpu_custom_call.1} parent=1 // pred_fallthru
      _
    // Predicated region
    $region6: #{tpu_custom_call.1} parent=1 // pred_check
      _
    $region7: #{tpu_custom_call.1} parent=1 // pred_check_branch
      %27 = sbr.rel (0) target = $region9
    $region8: #{tpu_custom_call.1} parent=1 // pred_region
      %29 = vsyncadd [#allocation6], 0
      %s30 = sshll.u32 %s1, 4
      %s31 = int_to_ptr.hbm [resolvable:$true] %s30
      %s32 = sshll.u32 [#allocation5], 4
      %s33 = int_to_ptr.vmem [resolvable:$true] %s32
      %38 = dma.hbm_to_vmem [thread:$0]  %s31, 2048, %s33, [#allocation6], 64, 64, 4
    $region9: #{tpu_custom_call.1} parent=1 // pred_fallthru
      _
    // Predicated region
    $region10: #{tpu_custom_call.1} parent=1 // pred_check
      _
    $region11: #{tpu_custom_call.1} parent=1 // pred_check_branch
      %40 = sbr.rel (0) target = $region13
    $region12: #{tpu_custom_call.1} parent=1 // pred_region
      _
    $region13: #{tpu_custom_call.1} parent=1 // pred_fallthru
      _
    // Predicated region
    $region14: #{tpu_custom_call.1} parent=1 // pred_check
      _
    $region15: #{tpu_custom_call.1} parent=1 // pred_check_branch
      %42 = sbr.rel (0) target = $region17
    $region16: #{tpu_custom_call.1} parent=1 // pred_region
      %44 = vsyncadd [#allocation6], 0
      %s45 = sshll.u32 %s3, 4
      %s46 = int_to_ptr.hbm [resolvable:$true] %s45
      %s47 = sshll.u32 [#allocation7], 4
      %s48 = int_to_ptr.vmem [resolvable:$true] %s47
      %53 = dma.hbm_to_vmem [thread:$0]  %s46, 2048, %s48, [#allocation6], 128, 128, 8
    $region17: #{tpu_custom_call.1} parent=1 // pred_fallthru
      _
    // Predicated region
    $region18: #{tpu_custom_call.1} parent=1 // pred_check
      _
    $region19: #{tpu_custom_call.1} parent=1 // pred_check_branch
      %55 = sbr.rel (0) target = $region21
    $region20: #{tpu_custom_call.1} parent=1 // pred_region
      _
    $region21: #{tpu_custom_call.1} parent=1 // pred_fallthru
      _
    // Predicated region
    $region22: #{tpu_custom_call.1} parent=1 // pred_check
      _
    $region23: #{tpu_custom_call.1} parent=1 // pred_check_branch
      %57 = sbr.rel (0) target = $region25
    $region24: #{tpu_custom_call.1} parent=1 // pred_region
      %59 = dma.done [#allocation3], 512
    $region25: #{tpu_custom_call.1} parent=1 // pred_fallthru
      _
    // Predicated region
    $region26: #{tpu_custom_call.1} parent=1 // pred_check
      _
    $region27: #{tpu_custom_call.1} parent=1 // pred_check_branch
      %61 = sbr.rel (0) target = $region29
    $region28: #{tpu_custom_call.1} parent=1 // pred_region
      %63 = dma.done [#allocation6], 2048
    $region29: #{tpu_custom_call.1} parent=1 // pred_fallthru
      _
    // Predicated region
    $region30: #{tpu_custom_call.1} parent=1 // pred_check
      _
    $region31: #{tpu_custom_call.1} parent=1 // pred_check_branch
      %65 = sbr.rel (0) target = $region33
    $region32: #{tpu_custom_call.1} parent=1 // pred_region
      %67 = dma.done [#allocation6], 2048
    $region33: #{tpu_custom_call.1} parent=1 // pred_fallthru
      _
    %v68 = vld [vmem:[#allocation2] sm:$0xff]
    %v69 = vld [vmem:[#allocation2 + $0x8] sm:$0xff]
    %v70 = vld [vmem:[#allocation2 + $0x10] sm:$0xff]
    %v71 = vld [vmem:[#allocation2 + $0x18] sm:$0xff]
    %v72 = vpack.c.bf16 %v70, %v68
    %v73 = vpack.c.bf16 %v71, %v69
    %v74 = vld [vmem:[#allocation5] sm:$0xf]
    %v75 = vld [vmem:[#allocation5 + $0x4] sm:$0xf]
    %v76 = vld [vmem:[#allocation5 + $0x8] sm:$0xf]
    %v77 = vld [vmem:[#allocation5 + $0xc] sm:$0xf]
    %v78 = vld [vmem:[#allocation5 + $0x10] sm:$0xf]
    %v79 = vld [vmem:[#allocation5 + $0x14] sm:$0xf]
    %v80 = vld [vmem:[#allocation5 + $0x18] sm:$0xf]
    %v81 = vld [vmem:[#allocation5 + $0x1c] sm:$0xf]
    %v82 = vld [vmem:[#allocation5 + $0x20] sm:$0xf]
    %v83 = vld [vmem:[#allocation5 + $0x24] sm:$0xf]
    %v84 = vld [vmem:[#allocation5 + $0x28] sm:$0xf]
    %v85 = vld [vmem:[#allocation5 + $0x2c] sm:$0xf]
    %v86 = vld [vmem:[#allocation5 + $0x30] sm:$0xf]
    %v87 = vld [vmem:[#allocation5 + $0x34] sm:$0xf]
    %v88 = vld [vmem:[#allocation5 + $0x38] sm:$0xf]
    %v89 = vld [vmem:[#allocation5 + $0x3c] sm:$0xf]
    %v90 = vld [vmem:[#allocation5 + $0x40] sm:$0xf]
    %v91 = vld [vmem:[#allocation5 + $0x44] sm:$0xf]
    %v92 = vld [vmem:[#allocation5 + $0x48] sm:$0xf]
    %v93 = vld [vmem:[#allocation5 + $0x4c] sm:$0xf]
    %v94 = vld [vmem:[#allocation5 + $0x50] sm:$0xf]
    %v95 = vld [vmem:[#allocation5 + $0x54] sm:$0xf]
    %v96 = vld [vmem:[#allocation5 + $0x58] sm:$0xf]
    %v97 = vld [vmem:[#allocation5 + $0x5c] sm:$0xf]
    %v98 = vld [vmem:[#allocation5 + $0x60] sm:$0xf]
    %v99 = vld [vmem:[#allocation5 + $0x64] sm:$0xf]
    %v100 = vld [vmem:[#allocation5 + $0x68] sm:$0xf]
    %v101 = vld [vmem:[#allocation5 + $0x6c] sm:$0xf]
    %v102 = vld [vmem:[#allocation5 + $0x70] sm:$0xf]
    %v103 = vld [vmem:[#allocation5 + $0x74] sm:$0xf]
    %v104 = vld [vmem:[#allocation5 + $0x78] sm:$0xf]
    %v105 = vld [vmem:[#allocation5 + $0x7c] sm:$0xf]
    %v106 = vld [vmem:[%s2] sm:$0x1]
    %v108 = vperm.slane %v106, 0
    %v142 = vunpack.c.l.b16 %v74
    %v143 = vunpack.c.l.b16 %v75
    %v144 = vunpack.c.l.b16 %v76
    %v145 = vunpack.c.l.b16 %v77
    %v146 = vunpack.c.l.b16 %v78
    %v147 = vunpack.c.l.b16 %v79
    %v148 = vunpack.c.l.b16 %v80
    %v149 = vunpack.c.l.b16 %v81
    %v150 = vunpack.c.l.b16 %v82
    %v151 = vunpack.c.l.b16 %v83
    %v152 = vunpack.c.l.b16 %v84
    %v153 = vunpack.c.l.b16 %v85
    %v154 = vunpack.c.l.b16 %v86
    %v155 = vunpack.c.l.b16 %v87
    %v156 = vunpack.c.l.b16 %v88
    %v157 = vunpack.c.l.b16 %v89
    %v158 = vunpack.c.l.b16 %v90
    %v159 = vunpack.c.l.b16 %v91
    %v160 = vunpack.c.l.b16 %v92
    %v161 = vunpack.c.l.b16 %v93
    %v162 = vunpack.c.l.b16 %v94
    %v163 = vunpack.c.l.b16 %v95
    %v164 = vunpack.c.l.b16 %v96
    %v165 = vunpack.c.l.b16 %v97
    %v166 = vunpack.c.l.b16 %v98
    %v167 = vunpack.c.l.b16 %v99
    %v168 = vunpack.c.l.b16 %v100
    %v169 = vunpack.c.l.b16 %v101
    %v170 = vunpack.c.l.b16 %v102
    %v171 = vunpack.c.l.b16 %v103
    %v172 = vunpack.c.l.b16 %v104
    %v173 = vunpack.c.l.b16 %v105
    %v174 = vpack.c.b16 %v143, %v142
    %v175 = vpack.c.b16 %v145, %v144
    %v176 = vpack.c.b16 %v147, %v146
    %v177 = vpack.c.b16 %v149, %v148
    %v178 = vpack.c.b16 %v151, %v150
    %v179 = vpack.c.b16 %v153, %v152
    %v180 = vpack.c.b16 %v155, %v154
    %v181 = vpack.c.b16 %v157, %v156
    %v182 = vpack.c.b16 %v159, %v158
    %v183 = vpack.c.b16 %v161, %v160
    %v184 = vpack.c.b16 %v163, %v162
    %v185 = vpack.c.b16 %v165, %v164
    %v186 = vpack.c.b16 %v167, %v166
    %v187 = vpack.c.b16 %v169, %v168
    %v188 = vpack.c.b16 %v171, %v170
    %v189 = vpack.c.b16 %v173, %v172
    %206 = vmatpush.bf16.msra.mxu0 %v181
    %207 = vmatpush.bf16.msra.mxu0 %v180
    %208 = vmatpush.bf16.msra.mxu0 %v179
    %209 = vmatpush.bf16.msra.mxu0 %v178
    %210 = vmatpush.bf16.msra.mxu0 %v177
    %211 = vmatpush.bf16.msra.mxu0 %v176
    %212 = vmatpush.bf16.msra.mxu0 %v175
    %213 = vmatpush.bf16.msra.mxu0 %v174
    %214 = vmatmul.bf16.gmra.mxu0 %v72
    %v215 = vpop.f32.mrf.mxu0
    %v216 = vadd.f32 %v108, %v215
    %v217 = vpop.f32.mrf.mxu0
    %v218 = vadd.f32 %v108, %v217
    %219 = vdwg.mxu0
    %220 = vmatpush.bf16.msra.mxu0 %v189
    %221 = vmatpush.bf16.msra.mxu0 %v188
    %222 = vmatpush.bf16.msra.mxu0 %v187
    %223 = vmatpush.bf16.msra.mxu0 %v186
    %224 = vmatpush.bf16.msra.mxu0 %v185
    %225 = vmatpush.bf16.msra.mxu0 %v184
    %226 = vmatpush.bf16.msra.mxu0 %v183
    %227 = vmatpush.bf16.msra.mxu0 %v182
    %228 = vmatmul.bf16.gmra.mxu0 %v73
    %v229 = vpop.f32.mrf.mxu0
    %v230 = vadd.f32 %v216, %v229
    %v231 = vpop.f32.mrf.mxu0
    %v232 = vadd.f32 %v218, %v231
    %233 = vdwg.mxu0
    %v234 = vtanh.pop %v230
    %v235 = vtanh.pop %v232
    %v236 = vpack.c.bf16 %v235, %v234
    %v237 = vld [vmem:[#allocation7] sm:$0xff]
    %v238 = vld [vmem:[#allocation7 + $0x8] sm:$0xff]
    %v239 = vld [vmem:[#allocation7 + $0x10] sm:$0xff]
    %v240 = vld [vmem:[#allocation7 + $0x18] sm:$0xff]
    %v241 = vld [vmem:[#allocation7 + $0x20] sm:$0xff]
    %v242 = vld [vmem:[#allocation7 + $0x28] sm:$0xff]
    %v243 = vld [vmem:[#allocation7 + $0x30] sm:$0xff]
    %v244 = vld [vmem:[#allocation7 + $0x38] sm:$0xff]
    %v245 = vld [vmem:[#allocation7 + $0x40] sm:$0xff]
    %v246 = vld [vmem:[#allocation7 + $0x48] sm:$0xff]
    %v247 = vld [vmem:[#allocation7 + $0x50] sm:$0xff]
    %v248 = vld [vmem:[#allocation7 + $0x58] sm:$0xff]
    %v249 = vld [vmem:[#allocation7 + $0x60] sm:$0xff]
    %v250 = vld [vmem:[#allocation7 + $0x68] sm:$0xff]
    %v251 = vld [vmem:[#allocation7 + $0x70] sm:$0xff]
    %v252 = vld [vmem:[#allocation7 + $0x78] sm:$0xff]
    %v253 = vld [vmem:[%s4] sm:$0x3]
    %v255 = vperm.slane %v253, 0
    %v256 = vperm.slane %v253, 1
    %v275 = vunpack.c.l.b16 %v237
    %v276 = vunpack.c.h.b16 %v237
    %v277 = vunpack.c.l.b16 %v238
    %v278 = vunpack.c.h.b16 %v238
    %v279 = vunpack.c.l.b16 %v239
    %v280 = vunpack.c.h.b16 %v239
    %v281 = vunpack.c.l.b16 %v240
    %v282 = vunpack.c.h.b16 %v240
    %v283 = vunpack.c.l.b16 %v241
    %v284 = vunpack.c.h.b16 %v241
    %v285 = vunpack.c.l.b16 %v242
    %v286 = vunpack.c.h.b16 %v242
    %v287 = vunpack.c.l.b16 %v243
    %v288 = vunpack.c.h.b16 %v243
    %v289 = vunpack.c.l.b16 %v244
    %v290 = vunpack.c.h.b16 %v244
    %v291 = vunpack.c.l.b16 %v245
    %v292 = vunpack.c.h.b16 %v245
    %v293 = vunpack.c.l.b16 %v246
    %v294 = vunpack.c.h.b16 %v246
    %v295 = vunpack.c.l.b16 %v247
    %v296 = vunpack.c.h.b16 %v247
    %v297 = vunpack.c.l.b16 %v248
    %v298 = vunpack.c.h.b16 %v248
    %v299 = vunpack.c.l.b16 %v249
    %v300 = vunpack.c.h.b16 %v249
    %v301 = vunpack.c.l.b16 %v250
    %v302 = vunpack.c.h.b16 %v250
    %v303 = vunpack.c.l.b16 %v251
    %v304 = vunpack.c.h.b16 %v251
    %v305 = vunpack.c.l.b16 %v252
    %v306 = vunpack.c.h.b16 %v252
    %v307 = vpack.c.b16 %v277, %v275
    %v308 = vpack.c.b16 %v278, %v276
    %v309 = vpack.c.b16 %v281, %v279
    %v310 = vpack.c.b16 %v282, %v280
    %v311 = vpack.c.b16 %v285, %v283
    %v312 = vpack.c.b16 %v286, %v284
    %v313 = vpack.c.b16 %v289, %v287
    %v314 = vpack.c.b16 %v290, %v288
    %v315 = vpack.c.b16 %v293, %v291
    %v316 = vpack.c.b16 %v294, %v292
    %v317 = vpack.c.b16 %v297, %v295
    %v318 = vpack.c.b16 %v298, %v296
    %v319 = vpack.c.b16 %v301, %v299
    %v320 = vpack.c.b16 %v302, %v300
    %v321 = vpack.c.b16 %v305, %v303
    %v322 = vpack.c.b16 %v306, %v304
    %339 = vmatpush.bf16.msra.mxu0 %v321
    %340 = vmatpush.bf16.msra.mxu0 %v319
    %341 = vmatpush.bf16.msra.mxu0 %v317
    %342 = vmatpush.bf16.msra.mxu0 %v315
    %343 = vmatpush.bf16.msra.mxu0 %v313
    %344 = vmatpush.bf16.msra.mxu0 %v311
    %345 = vmatpush.bf16.msra.mxu0 %v309
    %346 = vmatpush.bf16.msra.mxu0 %v307
    %347 = vmatmul.bf16.gmra.mxu0 %v236
    %v348 = vpop.f32.mrf.mxu0
    %v349 = vadd.f32 %v255, %v348
    %v350 = vpop.f32.mrf.mxu0
    %v351 = vadd.f32 %v255, %v350
    %352 = vdwg.mxu0
    %353 = vmatpush.bf16.msra.mxu0 %v322
    %354 = vmatpush.bf16.msra.mxu0 %v320
    %355 = vmatpush.bf16.msra.mxu0 %v318
    %356 = vmatpush.bf16.msra.mxu0 %v316
    %357 = vmatpush.bf16.msra.mxu0 %v314
    %358 = vmatpush.bf16.msra.mxu0 %v312
    %359 = vmatpush.bf16.msra.mxu0 %v310
    %360 = vmatpush.bf16.msra.mxu0 %v308
    %361 = vmatmul.bf16.gmra.mxu0 %v236
    %v362 = vpop.f32.mrf.mxu0
    %v363 = vadd.f32 %v256, %v362
    %v364 = vpop.f32.mrf.mxu0
    %v365 = vadd.f32 %v256, %v364
    %366 = vdwg.mxu0
    %v367 = vtanh.pop %v349
    %v368 = vtanh.pop %v363
    %v369 = vtanh.pop %v351
    %v370 = vtanh.pop %v365
    %371 = vst [vmem:[#allocation8] sm:$0xff] %v367
    %372 = vst [vmem:[#allocation8 + $0x8] sm:$0xff] %v368
    %373 = vst [vmem:[#allocation8 + $0x10] sm:$0xff] %v369
    %374 = vst [vmem:[#allocation8 + $0x18] sm:$0xff] %v370
    // Predicated region
    $region34: #{tpu_custom_call.1} parent=1 // pred_check
      _
    $region35: #{tpu_custom_call.1} parent=1 // pred_check_branch
      %376 = sbr.rel (0) target = $region37
    $region36: #{tpu_custom_call.1} parent=1 // pred_region
      %378 = vsyncadd [#allocation4], 0
      %s379 = sshll.u32 [#allocation8], 4
      %s380 = int_to_ptr.vmem [resolvable:$true] %s379
      %s381 = sshll.u32 %s5, 4
      %s382 = int_to_ptr.hbm [resolvable:$true] %s381
      %387 = dma.vmem_to_hbm [thread:$0]  %s380, 512, %s382, [#allocation4], 256, 256, 16
    $region37: #{tpu_custom_call.1} parent=1 // pred_fallthru
      _
    // Predicated region
    $region38: #{tpu_custom_call.1} parent=1 // pred_check
      _
    $region39: #{tpu_custom_call.1} parent=1 // pred_check_branch
      %389 = sbr.rel (0) target = $region41
    $region40: #{tpu_custom_call.1} parent=1 // pred_region
      %391 = dma.done [#allocation4], 512
    $region41: #{tpu_custom_call.1} parent=1 // pred_fallthru
      _
    %392 = vsyncpa [#allocation3], 1
    %393 = vsyncpa [#allocation6], 1
    %394 = vsyncpa [#allocation4], 1

</llo_original>
